<compile_context>
chip_gen: v5e
topology: v5e:2x2
jax: 0.10.0
libtpu: 0.0.40
codegen_flags: <defaults>
</compile_context>

<pallas_src>
import functools

import jax
import jax.numpy as jnp
from jax import lax
from jax.experimental import pallas as pl
from jax.experimental.pallas import tpu as pltpu

INIT_FAST_TAU = 4.0
INIT_SLOW_TAU = 16.0
FAST_TAU_SPAN = (-2.0, 2.0)   # normalization(x, [0,1], [-2,2]) == 4*x - 2
SLOW_TAU_SPAN = (-4.0, 4.0)   # normalization(x, [0,1], [-4,4]) == 8*x - 4


def _round_up(x, m):
    return (x + m - 1) // m * m


# ----------------------------------------------------------------------------
# Kernel: one grid step == Tc RNN timesteps.  State lives in VMEM scratch.
# ----------------------------------------------------------------------------
def _vmtrnn_seq_kernel(xw_ref, h0_ref, u0_ref, wh_ref, ominv_ref,
                       hu_out_ref, h_scr, u_scr):
    tc = xw_ref.shape[0]           # timesteps per grid step (static)
    fsp = h_scr.shape[-1]          # padded state width (static, multiple of 128)

    @pl.when(pl.program_id(0) == 0)
    def _init():
        h_scr[...] = h0_ref[...]
        u_scr[...] = u0_ref[...]

    # Hoisted loads / broadcasts (do NOT re-emit these per loop iteration).
    wh = wh_ref[...]                                           # (FSp, FSp), tau-folded
    ominv = jnp.broadcast_to(ominv_ref[...], h_scr.shape)      # (Bp, FSp)

    def step(i, carry):
        h, u = carry
        # x@W_x (tau-folded) was hoisted to the wrapper -> single MXU matmul here.
        pre = xw_ref[i] + jnp.dot(h, wh, preferred_element_type=jnp.float32)
        new_u = ominv * u + pre
        new_h = jnp.tanh(new_u)
        # Lane-dense stores: h in lanes [0, FSp), u in lanes [FSp, 2*FSp).
        hu_out_ref[i, :, pl.ds(0, fsp)] = new_h
        hu_out_ref[i, :, pl.ds(fsp, fsp)] = new_u
        return new_h, new_u

    h_f, u_f = lax.fori_loop(0, tc, step, (h_scr[...], u_scr[...]), unroll=True)
    h_scr[...] = h_f
    u_scr[...] = u_f


# ----------------------------------------------------------------------------
# Wrapper
# ----------------------------------------------------------------------------
def _compute_taus(params):
    """Variable time constants — depend only on parameters, computed once."""
    f_sig = jax.nn.sigmoid(
        jnp.sum(params["fast_tau_pb"] * params["fast_tau_w"], axis=-1, keepdims=True)
        + params["fast_tau_b"])
    s_sig = jax.nn.sigmoid(
        jnp.sum(params["slow_tau_pb"] * params["slow_tau_w"], axis=-1, keepdims=True)
        + params["slow_tau_b"])
    fast_tau = INIT_FAST_TAU + ((FAST_TAU_SPAN[1] - FAST_TAU_SPAN[0]) * f_sig
                                + FAST_TAU_SPAN[0])
    slow_tau = INIT_SLOW_TAU + ((SLOW_TAU_SPAN[1] - SLOW_TAU_SPAN[0]) * s_sig
                                + SLOW_TAU_SPAN[0])
    return fast_tau, slow_tau


@functools.partial(jax.jit, static_argnames=("tc",))
def vmtrnn_sequence(x_seq, h_fast0, h_slow0, u_fast0, u_slow0, params, tc=8):
    """Run the VMTRNN cell over x_seq (T, B, input_dim) in a single pallas_call.

    Returns:
      h_seq (T, B, F+S): tanh states per step, packed [fast | slow]
      u_seq (T, B, F+S): internal states per step, packed [fast | slow]
      fast_tau, slow_tau: (1, 1) time constants
    """
    T, B, I = x_seq.shape
    F = params["w_f2f"].shape[0]
    S = params["w_s2s"].shape[0]
    FS = F + S

    # Padded dims: lane-dense state width, sublane-aligned batch, chunked time.
    FSp = _round_up(FS, 128)
    Bp = _round_up(max(B, 8), 8)
    Tc = max(1, min(tc, T))
    Tp = _round_up(T, Tc)

    fast_tau, slow_tau = _compute_taus(params)

    inv = jnp.concatenate(
        [jnp.broadcast_to(1.0 / fast_tau, (1, F)),
         jnp.broadcast_to(1.0 / slow_tau, (1, S))], axis=-1).astype(jnp.float32)
    ominv = (1.0 - inv).astype(jnp.float32)
    # Padded lanes of ominv are zero so padded u lanes stay exactly zero.
    ominv_p = jnp.pad(ominv, ((0, 0), (0, FSp - FS)))

    # Fused weights with 1/tau folded into the output columns (inv commutes).
    w_x = jnp.concatenate(
        [params["w_i2f"], jnp.zeros((I, S), jnp.float32)], axis=-1) * inv     # (I, F+S)
    w_h = jnp.concatenate(
        [jnp.concatenate([params["w_f2f"], params["w_f2s"]], axis=-1),        # (F, F+S)
         jnp.concatenate([params["w_s2f"], params["w_s2s"]], axis=-1)],       # (S, F+S)
        axis=0) * inv                                                         # (F+S, F+S)
    w_x_p = jnp.pad(w_x, ((0, 0), (0, FSp - FS)))
    w_h_p = jnp.pad(w_h, ((0, FSp - FS), (0, FSp - FS)))

    h0 = jnp.pad(jnp.concatenate([h_fast0, h_slow0], axis=-1).astype(jnp.float32),
                 ((0, Bp - B), (0, FSp - FS)))                                # (Bp, FSp)
    u0 = jnp.pad(jnp.concatenate([u_fast0, u_slow0], axis=-1).astype(jnp.float32),
                 ((0, Bp - B), (0, FSp - FS)))                                # (Bp, FSp)

    # Hoisted non-recurrent input projection: one well-shaped matmul for all T.
    x_p = jnp.pad(x_seq.astype(jnp.float32),
                  ((0, Tp - T), (0, Bp - B), (0, 0)))                         # (Tp, Bp, I)
    xw_seq = (x_p.reshape(Tp * Bp, I) @ w_x_p).reshape(Tp, Bp, FSp)

    hu_seq = pl.pallas_call(
        _vmtrnn_seq_kernel,
        out_shape=jax.ShapeDtypeStruct((Tp, Bp, 2 * FSp), jnp.float32),
        grid=(Tp // Tc,),
        in_specs=[
            pl.BlockSpec((Tc, Bp, FSp), lambda t: (t, 0, 0)),   # xw, Tc steps per block
            pl.BlockSpec((Bp, FSp), lambda t: (0, 0)),          # h0   (resident)
            pl.BlockSpec((Bp, FSp), lambda t: (0, 0)),          # u0   (resident)
            pl.BlockSpec((FSp, FSp), lambda t: (0, 0)),         # W_h  (resident)
            pl.BlockSpec((1, FSp), lambda t: (0, 0)),           # 1 - 1/tau (resident)
        ],
        out_specs=pl.BlockSpec((Tc, Bp, 2 * FSp), lambda t: (t, 0, 0)),
        scratch_shapes=[pltpu.VMEM((Bp, FSp), jnp.float32),     # h carry
                        pltpu.VMEM((Bp, FSp), jnp.float32)],    # u carry
        compiler_params=pltpu.CompilerParams(
            dimension_semantics=("arbitrary",)),                # sequential: state carry
    )(xw_seq, h0, u0, w_h_p, ominv_p)

    h_seq = hu_seq[:T, :B, :FS]
    u_seq = hu_seq[:T, :B, FSp:FSp + FS]
    return h_seq, u_seq, fast_tau, slow_tau


def vmtrnn_cell(x, h_fast, h_slow, u_fast, u_slow, params):
    """Single-step API matching the PyTorch module forward."""
    F = params["w_f2f"].shape[0]
    h_seq, u_seq, fast_tau, slow_tau = vmtrnn_sequence(
        x[None], h_fast, h_slow, u_fast, u_slow, params, tc=1)
    new_h, new_u = h_seq[0], u_seq[0]
    return (new_h[:, :F], new_h[:, F:], new_u[:, :F], new_u[:, F:],
            fast_tau, slow_tau)


# ----------------------------------------------------------------------------
# Pure-JAX reference (mirrors the PyTorch forward, one step)
# ----------------------------------------------------------------------------
def _reference_step(x, hf, hs, uf, us, p):
    fast_tau, slow_tau = _compute_taus(p)
    fast_in = x @ p["w_i2f"] + hf @ p["w_f2f"] + hs @ p["w_s2f"]
    slow_in = hf @ p["w_f2s"] + hs @ p["w_s2s"]
    new_u_fast = (1.0 - 1.0 / fast_tau) * uf + (1.0 / fast_tau) * fast_in
    new_u_slow = (1.0 - 1.0 / slow_tau) * us + (1.0 / slow_tau) * slow_in
    return (jnp.tanh(new_u_fast), jnp.tanh(new_u_slow),
            new_u_fast, new_u_slow, fast_tau, slow_tau)


if __name__ == "__main__":
    T, B, INPUT_DIM, FAST_DIM, SLOW_DIM = 8, 2, 8, 32, 16

    key = jax.random.PRNGKey(0)
    keys = jax.random.split(key, 12)

    params = {
        # Linear weights stored (in_features, out_features)
        "w_i2f": 0.1 * jax.random.normal(keys[0], (INPUT_DIM, FAST_DIM), jnp.float32),
        "w_f2f": 0.1 * jax.random.normal(keys[1], (FAST_DIM, FAST_DIM), jnp.float32),
        "w_s2f": 0.1 * jax.random.normal(keys[2], (SLOW_DIM, FAST_DIM), jnp.float32),
        "w_f2s": 0.1 * jax.random.normal(keys[3], (FAST_DIM, SLOW_DIM), jnp.float32),
        "w_s2s": 0.1 * jax.random.normal(keys[4], (SLOW_DIM, SLOW_DIM), jnp.float32),
        # tau parameter-bias vectors and their 100->1 layers
        "fast_tau_pb": jax.random.normal(keys[5], (1, 100), jnp.float32),
        "slow_tau_pb": jax.random.normal(keys[6], (1, 100), jnp.float32),
        "fast_tau_w": 0.1 * jax.random.normal(keys[7], (1, 100), jnp.float32),
        "fast_tau_b": 0.1 * jax.random.normal(keys[8], (1, 1), jnp.float32),
        "slow_tau_w": 0.1 * jax.random.normal(keys[9], (1, 100), jnp.float32),
        "slow_tau_b": 0.1 * jax.random.normal(keys[10], (1, 1), jnp.float32),
    }

    x_seq = jax.random.normal(keys[11], (T, B, INPUT_DIM), jnp.float32)
    # state=None path of the module: all-zero initial states
    h_fast = jnp.zeros((B, FAST_DIM), jnp.float32)
    h_slow = jnp.zeros((B, SLOW_DIM), jnp.float32)
    u_fast = jnp.zeros((B, FAST_DIM), jnp.float32)
    u_slow = jnp.zeros((B, SLOW_DIM), jnp.float32)

    # --- sequence kernel (time loop inside the kernel) -----------------------
    h_seq, u_seq, ftau, stau = jax.block_until_ready(
        vmtrnn_sequence(x_seq, h_fast, h_slow, u_fast, u_slow, params))

    # --- reference: call the per-step module forward T times -----------------
    hf, hs, uf, us = h_fast, h_slow, u_fast, u_slow
    for t in range(T):
        hf, hs, uf, us, rftau, rstau = _reference_step(x_seq[t], hf, hs, uf, us, params)
        ref_h = jnp.concatenate([hf, hs], axis=-1)
        ref_u = jnp.concatenate([uf, us], axis=-1)
        assert jnp.allclose(h_seq[t], ref_h, atol=5e-5, rtol=1e-4)
        assert jnp.allclose(u_seq[t], ref_u, atol=5e-5, rtol=1e-4)
    assert jnp.allclose(ftau, rftau, atol=1e-6)
    assert jnp.allclose(stau, rstau, atol=1e-6)

    # --- single-step API (module forward signature) ---------------------------
    outs = jax.block_until_ready(
        vmtrnn_cell(x_seq[0], h_fast, h_slow, u_fast, u_slow, params))
    refs = _reference_step(x_seq[0], h_fast, h_slow, u_fast, u_slow, params)
    for o, r in zip(outs, refs):
        assert o.shape == r.shape
        assert jnp.allclose(o, r, atol=5e-5, rtol=1e-4)

    print("KERNEL_OK")
</pallas_src>

<mosaic_0001>
module attributes {stable_mosaic.version = 11 : i64} {
  func.func @_vmtrnn_seq_kernel(%arg0: i32, %arg1: memref<8x8x128xf32, #tpu.memory_space<vmem>>, %arg2: memref<8x128xf32, #tpu.memory_space<vmem>>, %arg3: memref<8x128xf32, #tpu.memory_space<vmem>>, %arg4: memref<128x128xf32, #tpu.memory_space<vmem>>, %arg5: memref<1x128xf32, #tpu.memory_space<vmem>>, %arg6: memref<8x8x256xf32, #tpu.memory_space<vmem>>, %arg7: memref<8x128xf32, #tpu.memory_space<vmem>>, %arg8: memref<8x128xf32, #tpu.memory_space<vmem>>) attributes {dimension_semantics = [#tpu.dimension_semantics<arbitrary>], iteration_bounds = array<i64: 1>, scalar_prefetch = 0 : i64, scratch_operands = 2 : i64, tpu.core_type = #tpu.core_type<tc>, window_params = [{transform_indices = @transform_0, window_bounds = array<i64: 8, 8, 128>}, {pipeline_mode = #tpu.pipeline_mode<synchronous>, transform_indices = @transform_1, window_bounds = array<i64: 8, 128>}, {pipeline_mode = #tpu.pipeline_mode<synchronous>, transform_indices = @transform_2, window_bounds = array<i64: 8, 128>}, {pipeline_mode = #tpu.pipeline_mode<synchronous>, transform_indices = @transform_3, window_bounds = array<i64: 128, 128>}, {pipeline_mode = #tpu.pipeline_mode<synchronous>, transform_indices = @transform_4, window_bounds = array<i64: 1, 128>}, {transform_indices = @transform_5, window_bounds = array<i64: 8, 8, 256>}]} {
    %c0_i32 = arith.constant 0 : i32
    %0 = arith.cmpi eq, %arg0, %c0_i32 : i32
    %1 = arith.extui %0 : i1 to i32
    %c0_i32_0 = arith.constant 0 : i32
    %2 = arith.cmpi ne, %1, %c0_i32_0 : i32
    scf.if %2 {
      %c0_67 = arith.constant 0 : index
      %c0_68 = arith.constant 0 : index
      %139 = vector.load %arg2[%c0_67, %c0_68] : memref<8x128xf32, #tpu.memory_space<vmem>>, vector<8x128xf32>
      %c0_69 = arith.constant 0 : index
      %c0_70 = arith.constant 0 : index
      %140 = vector.load %arg7[%c0_69, %c0_70] : memref<8x128xf32, #tpu.memory_space<vmem>>, vector<8x128xf32>
      tpu.vector_store %arg7[%c0_69, %c0_70], %139 {strides = array<i32>} : memref<8x128xf32, #tpu.memory_space<vmem>>, vector<8x128xf32>,
      %c0_71 = arith.constant 0 : index
      %c0_72 = arith.constant 0 : index
      %141 = vector.load %arg3[%c0_71, %c0_72] : memref<8x128xf32, #tpu.memory_space<vmem>>, vector<8x128xf32>
      %c0_73 = arith.constant 0 : index
      %c0_74 = arith.constant 0 : index
      %142 = vector.load %arg8[%c0_73, %c0_74] : memref<8x128xf32, #tpu.memory_space<vmem>>, vector<8x128xf32>
      tpu.vector_store %arg8[%c0_73, %c0_74], %141 {strides = array<i32>} : memref<8x128xf32, #tpu.memory_space<vmem>>, vector<8x128xf32>,
    } else {
    }
    %c0 = arith.constant 0 : index
    %c0_1 = arith.constant 0 : index
    %3 = vector.load %arg4[%c0, %c0_1] : memref<128x128xf32, #tpu.memory_space<vmem>>, vector<128x128xf32>
    %c0_2 = arith.constant 0 : index
    %c0_3 = arith.constant 0 : index
    %4 = vector.load %arg5[%c0_2, %c0_3] : memref<1x128xf32, #tpu.memory_space<vmem>>, vector<1x128xf32>
    %5 = vector.shape_cast %4 : vector<1x128xf32> to vector<1x128xf32>
    %6 = vector.broadcast %5 : vector<1x128xf32> to vector<8x128xf32>
    %c0_4 = arith.constant 0 : index
    %c0_5 = arith.constant 0 : index
    %7 = vector.load %arg7[%c0_4, %c0_5] : memref<8x128xf32, #tpu.memory_space<vmem>>, vector<8x128xf32>
    %c0_6 = arith.constant 0 : index
    %c0_7 = arith.constant 0 : index
    %8 = vector.load %arg8[%c0_6, %c0_7] : memref<8x128xf32, #tpu.memory_space<vmem>>, vector<8x128xf32>
    %c0_i32_8 = arith.constant 0 : i32
    %9 = arith.index_cast %c0_i32_8 : i32 to index
    %c0_9 = arith.constant 0 : index
    %c0_10 = arith.constant 0 : index
    %10 = vector.load %arg1[%9, %c0_9, %c0_10] : memref<8x8x128xf32, #tpu.memory_space<vmem>>, vector<1x8x128xf32>
    %11 = vector.shape_cast %10 : vector<1x8x128xf32> to vector<8x128xf32>
    %cst = arith.constant dense<0.000000e+00> : vector<8x128xf32>
    %12 = tpu.matmul %7, %3, %cst {dimension_numbers = #tpu.dot_dimension_numbers<[1], [0], [0], [1], [0, 0, 1, 1], [], []>} : vector<8x128xf32>, vector<128x128xf32>, vector<8x128xf32> -> vector<8x128xf32>
    %13 = arith.addf %11, %12 : vector<8x128xf32>
    %14 = arith.mulf %6, %8 : vector<8x128xf32>
    %15 = arith.addf %14, %13 : vector<8x128xf32>
    %16 = math.tanh %15 : vector<8x128xf32>
    %17 = arith.index_cast %c0_i32_8 : i32 to index
    %c0_11 = arith.constant 0 : index
    %c0_12 = arith.constant 0 : index
    %18 = vector.load %arg6[%17, %c0_11, %c0_12] : memref<8x8x256xf32, #tpu.memory_space<vmem>>, vector<1x8x128xf32>
    %19 = vector.shape_cast %18 : vector<1x8x128xf32> to vector<8x128xf32>
    %20 = vector.shape_cast %16 : vector<8x128xf32> to vector<1x8x128xf32>
    tpu.vector_store %arg6[%17, %c0_11, %c0_12], %20 {strides = array<i32>} : memref<8x8x256xf32, #tpu.memory_space<vmem>>, vector<1x8x128xf32>,
    %21 = arith.index_cast %c0_i32_8 : i32 to index
    %c0_13 = arith.constant 0 : index
    %c128 = arith.constant 128 : index
    %22 = vector.load %arg6[%21, %c0_13, %c128] : memref<8x8x256xf32, #tpu.memory_space<vmem>>, vector<1x8x128xf32>
    %23 = vector.shape_cast %22 : vector<1x8x128xf32> to vector<8x128xf32>
    %24 = vector.shape_cast %15 : vector<8x128xf32> to vector<1x8x128xf32>
    tpu.vector_store %arg6[%21, %c0_13, %c128], %24 {strides = array<i32>} : memref<8x8x256xf32, #tpu.memory_space<vmem>>, vector<1x8x128xf32>,
    %c1_i32 = arith.constant 1 : i32
    %25 = arith.index_cast %c1_i32 : i32 to index
    %c0_14 = arith.constant 0 : index
    %c0_15 = arith.constant 0 : index
    %26 = vector.load %arg1[%25, %c0_14, %c0_15] : memref<8x8x128xf32, #tpu.memory_space<vmem>>, vector<1x8x128xf32>
    %27 = vector.shape_cast %26 : vector<1x8x128xf32> to vector<8x128xf32>
    %cst_16 = arith.constant dense<0.000000e+00> : vector<8x128xf32>
    %28 = tpu.matmul %16, %3, %cst_16 {dimension_numbers = #tpu.dot_dimension_numbers<[1], [0], [0], [1], [0, 0, 1, 1], [], []>} : vector<8x128xf32>, vector<128x128xf32>, vector<8x128xf32> -> vector<8x128xf32>
    %29 = arith.addf %27, %28 : vector<8x128xf32>
    %30 = arith.mulf %6, %15 : vector<8x128xf32>
    %31 = arith.addf %30, %29 : vector<8x128xf32>
    %32 = math.tanh %31 : vector<8x128xf32>
    %33 = arith.index_cast %c1_i32 : i32 to index
    %c0_17 = arith.constant 0 : index
    %c0_18 = arith.constant 0 : index
    %34 = vector.load %arg6[%33, %c0_17, %c0_18] : memref<8x8x256xf32, #tpu.memory_space<vmem>>, vector<1x8x128xf32>
    %35 = vector.shape_cast %34 : vector<1x8x128xf32> to vector<8x128xf32>
    %36 = vector.shape_cast %32 : vector<8x128xf32> to vector<1x8x128xf32>
    tpu.vector_store %arg6[%33, %c0_17, %c0_18], %36 {strides = array<i32>} : memref<8x8x256xf32, #tpu.memory_space<vmem>>, vector<1x8x128xf32>,
    %37 = arith.index_cast %c1_i32 : i32 to index
    %c0_19 = arith.constant 0 : index
    %c128_20 = arith.constant 128 : index
    %38 = vector.load %arg6[%37, %c0_19, %c128_20] : memref<8x8x256xf32, #tpu.memory_space<vmem>>, vector<1x8x128xf32>
    %39 = vector.shape_cast %38 : vector<1x8x128xf32> to vector<8x128xf32>
    %40 = vector.shape_cast %31 : vector<8x128xf32> to vector<1x8x128xf32>
    tpu.vector_store %arg6[%37, %c0_19, %c128_20], %40 {strides = array<i32>} : memref<8x8x256xf32, #tpu.memory_space<vmem>>, vector<1x8x128xf32>,
    %c2_i32 = arith.constant 2 : i32
    %41 = arith.index_cast %c2_i32 : i32 to index
    %c0_21 = arith.constant 0 : index
    %c0_22 = arith.constant 0 : index
    %42 = vector.load %arg1[%41, %c0_21, %c0_22] : memref<8x8x128xf32, #tpu.memory_space<vmem>>, vector<1x8x128xf32>
    %43 = vector.shape_cast %42 : vector<1x8x128xf32> to vector<8x128xf32>
    %cst_23 = arith.constant dense<0.000000e+00> : vector<8x128xf32>
    %44 = tpu.matmul %32, %3, %cst_23 {dimension_numbers = #tpu.dot_dimension_numbers<[1], [0], [0], [1], [0, 0, 1, 1], [], []>} : vector<8x128xf32>, vector<128x128xf32>, vector<8x128xf32> -> vector<8x128xf32>
    %45 = arith.addf %43, %44 : vector<8x128xf32>
    %46 = arith.mulf %6, %31 : vector<8x128xf32>
    %47 = arith.addf %46, %45 : vector<8x128xf32>
    %48 = math.tanh %47 : vector<8x128xf32>
    %49 = arith.index_cast %c2_i32 : i32 to index
    %c0_24 = arith.constant 0 : index
    %c0_25 = arith.constant 0 : index
    %50 = vector.load %arg6[%49, %c0_24, %c0_25] : memref<8x8x256xf32, #tpu.memory_space<vmem>>, vector<1x8x128xf32>
    %51 = vector.shape_cast %50 : vector<1x8x128xf32> to vector<8x128xf32>
    %52 = vector.shape_cast %48 : vector<8x128xf32> to vector<1x8x128xf32>
    tpu.vector_store %arg6[%49, %c0_24, %c0_25], %52 {strides = array<i32>} : memref<8x8x256xf32, #tpu.memory_space<vmem>>, vector<1x8x128xf32>,
    %53 = arith.index_cast %c2_i32 : i32 to index
    %c0_26 = arith.constant 0 : index
    %c128_27 = arith.constant 128 : index
    %54 = vector.load %arg6[%53, %c0_26, %c128_27] : memref<8x8x256xf32, #tpu.memory_space<vmem>>, vector<1x8x128xf32>
    %55 = vector.shape_cast %54 : vector<1x8x128xf32> to vector<8x128xf32>
    %56 = vector.shape_cast %47 : vector<8x128xf32> to vector<1x8x128xf32>
    tpu.vector_store %arg6[%53, %c0_26, %c128_27], %56 {strides = array<i32>} : memref<8x8x256xf32, #tpu.memory_space<vmem>>, vector<1x8x128xf32>,
    %c3_i32 = arith.constant 3 : i32
    %57 = arith.index_cast %c3_i32 : i32 to index
    %c0_28 = arith.constant 0 : index
    %c0_29 = arith.constant 0 : index
    %58 = vector.load %arg1[%57, %c0_28, %c0_29] : memref<8x8x128xf32, #tpu.memory_space<vmem>>, vector<1x8x128xf32>
    %59 = vector.shape_cast %58 : vector<1x8x128xf32> to vector<8x128xf32>
    %cst_30 = arith.constant dense<0.000000e+00> : vector<8x128xf32>
    %60 = tpu.matmul %48, %3, %cst_30 {dimension_numbers = #tpu.dot_dimension_numbers<[1], [0], [0], [1], [0, 0, 1, 1], [], []>} : vector<8x128xf32>, vector<128x128xf32>, vector<8x128xf32> -> vector<8x128xf32>
    %61 = arith.addf %59, %60 : vector<8x128xf32>
    %62 = arith.mulf %6, %47 : vector<8x128xf32>
    %63 = arith.addf %62, %61 : vector<8x128xf32>
    %64 = math.tanh %63 : vector<8x128xf32>
    %65 = arith.index_cast %c3_i32 : i32 to index
    %c0_31 = arith.constant 0 : index
    %c0_32 = arith.constant 0 : index
    %66 = vector.load %arg6[%65, %c0_31, %c0_32] : memref<8x8x256xf32, #tpu.memory_space<vmem>>, vector<1x8x128xf32>
    %67 = vector.shape_cast %66 : vector<1x8x128xf32> to vector<8x128xf32>
    %68 = vector.shape_cast %64 : vector<8x128xf32> to vector<1x8x128xf32>
    tpu.vector_store %arg6[%65, %c0_31, %c0_32], %68 {strides = array<i32>} : memref<8x8x256xf32, #tpu.memory_space<vmem>>, vector<1x8x128xf32>,
    %69 = arith.index_cast %c3_i32 : i32 to index
    %c0_33 = arith.constant 0 : index
    %c128_34 = arith.constant 128 : index
    %70 = vector.load %arg6[%69, %c0_33, %c128_34] : memref<8x8x256xf32, #tpu.memory_space<vmem>>, vector<1x8x128xf32>
    %71 = vector.shape_cast %70 : vector<1x8x128xf32> to vector<8x128xf32>
    %72 = vector.shape_cast %63 : vector<8x128xf32> to vector<1x8x128xf32>
    tpu.vector_store %arg6[%69, %c0_33, %c128_34], %72 {strides = array<i32>} : memref<8x8x256xf32, #tpu.memory_space<vmem>>, vector<1x8x128xf32>,
    %c4_i32 = arith.constant 4 : i32
    %73 = arith.index_cast %c4_i32 : i32 to index
    %c0_35 = arith.constant 0 : index
    %c0_36 = arith.constant 0 : index
    %74 = vector.load %arg1[%73, %c0_35, %c0_36] : memref<8x8x128xf32, #tpu.memory_space<vmem>>, vector<1x8x128xf32>
    %75 = vector.shape_cast %74 : vector<1x8x128xf32> to vector<8x128xf32>
    %cst_37 = arith.constant dense<0.000000e+00> : vector<8x128xf32>
    %76 = tpu.matmul %64, %3, %cst_37 {dimension_numbers = #tpu.dot_dimension_numbers<[1], [0], [0], [1], [0, 0, 1, 1], [], []>} : vector<8x128xf32>, vector<128x128xf32>, vector<8x128xf32> -> vector<8x128xf32>
    %77 = arith.addf %75, %76 : vector<8x128xf32>
    %78 = arith.mulf %6, %63 : vector<8x128xf32>
    %79 = arith.addf %78, %77 : vector<8x128xf32>
    %80 = math.tanh %79 : vector<8x128xf32>
    %81 = arith.index_cast %c4_i32 : i32 to index
    %c0_38 = arith.constant 0 : index
    %c0_39 = arith.constant 0 : index
    %82 = vector.load %arg6[%81, %c0_38, %c0_39] : memref<8x8x256xf32, #tpu.memory_space<vmem>>, vector<1x8x128xf32>
    %83 = vector.shape_cast %82 : vector<1x8x128xf32> to vector<8x128xf32>
    %84 = vector.shape_cast %80 : vector<8x128xf32> to vector<1x8x128xf32>
    tpu.vector_store %arg6[%81, %c0_38, %c0_39], %84 {strides = array<i32>} : memref<8x8x256xf32, #tpu.memory_space<vmem>>, vector<1x8x128xf32>,
    %85 = arith.index_cast %c4_i32 : i32 to index
    %c0_40 = arith.constant 0 : index
    %c128_41 = arith.constant 128 : index
    %86 = vector.load %arg6[%85, %c0_40, %c128_41] : memref<8x8x256xf32, #tpu.memory_space<vmem>>, vector<1x8x128xf32>
    %87 = vector.shape_cast %86 : vector<1x8x128xf32> to vector<8x128xf32>
    %88 = vector.shape_cast %79 : vector<8x128xf32> to vector<1x8x128xf32>
    tpu.vector_store %arg6[%85, %c0_40, %c128_41], %88 {strides = array<i32>} : memref<8x8x256xf32, #tpu.memory_space<vmem>>, vector<1x8x128xf32>,
    %c5_i32 = arith.constant 5 : i32
    %89 = arith.index_cast %c5_i32 : i32 to index
    %c0_42 = arith.constant 0 : index
    %c0_43 = arith.constant 0 : index
    %90 = vector.load %arg1[%89, %c0_42, %c0_43] : memref<8x8x128xf32, #tpu.memory_space<vmem>>, vector<1x8x128xf32>
    %91 = vector.shape_cast %90 : vector<1x8x128xf32> to vector<8x128xf32>
    %cst_44 = arith.constant dense<0.000000e+00> : vector<8x128xf32>
    %92 = tpu.matmul %80, %3, %cst_44 {dimension_numbers = #tpu.dot_dimension_numbers<[1], [0], [0], [1], [0, 0, 1, 1], [], []>} : vector<8x128xf32>, vector<128x128xf32>, vector<8x128xf32> -> vector<8x128xf32>
    %93 = arith.addf %91, %92 : vector<8x128xf32>
    %94 = arith.mulf %6, %79 : vector<8x128xf32>
    %95 = arith.addf %94, %93 : vector<8x128xf32>
    %96 = math.tanh %95 : vector<8x128xf32>
    %97 = arith.index_cast %c5_i32 : i32 to index
    %c0_45 = arith.constant 0 : index
    %c0_46 = arith.constant 0 : index
    %98 = vector.load %arg6[%97, %c0_45, %c0_46] : memref<8x8x256xf32, #tpu.memory_space<vmem>>, vector<1x8x128xf32>
    %99 = vector.shape_cast %98 : vector<1x8x128xf32> to vector<8x128xf32>
    %100 = vector.shape_cast %96 : vector<8x128xf32> to vector<1x8x128xf32>
    tpu.vector_store %arg6[%97, %c0_45, %c0_46], %100 {strides = array<i32>} : memref<8x8x256xf32, #tpu.memory_space<vmem>>, vector<1x8x128xf32>,
    %101 = arith.index_cast %c5_i32 : i32 to index
    %c0_47 = arith.constant 0 : index
    %c128_48 = arith.constant 128 : index
    %102 = vector.load %arg6[%101, %c0_47, %c128_48] : memref<8x8x256xf32, #tpu.memory_space<vmem>>, vector<1x8x128xf32>
    %103 = vector.shape_cast %102 : vector<1x8x128xf32> to vector<8x128xf32>
    %104 = vector.shape_cast %95 : vector<8x128xf32> to vector<1x8x128xf32>
    tpu.vector_store %arg6[%101, %c0_47, %c128_48], %104 {strides = array<i32>} : memref<8x8x256xf32, #tpu.memory_space<vmem>>, vector<1x8x128xf32>,
    %c6_i32 = arith.constant 6 : i32
    %105 = arith.index_cast %c6_i32 : i32 to index
    %c0_49 = arith.constant 0 : index
    %c0_50 = arith.constant 0 : index
    %106 = vector.load %arg1[%105, %c0_49, %c0_50] : memref<8x8x128xf32, #tpu.memory_space<vmem>>, vector<1x8x128xf32>
    %107 = vector.shape_cast %106 : vector<1x8x128xf32> to vector<8x128xf32>
    %cst_51 = arith.constant dense<0.000000e+00> : vector<8x128xf32>
    %108 = tpu.matmul %96, %3, %cst_51 {dimension_numbers = #tpu.dot_dimension_numbers<[1], [0], [0], [1], [0, 0, 1, 1], [], []>} : vector<8x128xf32>, vector<128x128xf32>, vector<8x128xf32> -> vector<8x128xf32>
    %109 = arith.addf %107, %108 : vector<8x128xf32>
    %110 = arith.mulf %6, %95 : vector<8x128xf32>
    %111 = arith.addf %110, %109 : vector<8x128xf32>
    %112 = math.tanh %111 : vector<8x128xf32>
    %113 = arith.index_cast %c6_i32 : i32 to index
    %c0_52 = arith.constant 0 : index
    %c0_53 = arith.constant 0 : index
    %114 = vector.load %arg6[%113, %c0_52, %c0_53] : memref<8x8x256xf32, #tpu.memory_space<vmem>>, vector<1x8x128xf32>
    %115 = vector.shape_cast %114 : vector<1x8x128xf32> to vector<8x128xf32>
    %116 = vector.shape_cast %112 : vector<8x128xf32> to vector<1x8x128xf32>
    tpu.vector_store %arg6[%113, %c0_52, %c0_53], %116 {strides = array<i32>} : memref<8x8x256xf32, #tpu.memory_space<vmem>>, vector<1x8x128xf32>,
    %117 = arith.index_cast %c6_i32 : i32 to index
    %c0_54 = arith.constant 0 : index
    %c128_55 = arith.constant 128 : index
    %118 = vector.load %arg6[%117, %c0_54, %c128_55] : memref<8x8x256xf32, #tpu.memory_space<vmem>>, vector<1x8x128xf32>
    %119 = vector.shape_cast %118 : vector<1x8x128xf32> to vector<8x128xf32>
    %120 = vector.shape_cast %111 : vector<8x128xf32> to vector<1x8x128xf32>
    tpu.vector_store %arg6[%117, %c0_54, %c128_55], %120 {strides = array<i32>} : memref<8x8x256xf32, #tpu.memory_space<vmem>>, vector<1x8x128xf32>,
    %c7_i32 = arith.constant 7 : i32
    %121 = arith.index_cast %c7_i32 : i32 to index
    %c0_56 = arith.constant 0 : index
    %c0_57 = arith.constant 0 : index
    %122 = vector.load %arg1[%121, %c0_56, %c0_57] : memref<8x8x128xf32, #tpu.memory_space<vmem>>, vector<1x8x128xf32>
    %123 = vector.shape_cast %122 : vector<1x8x128xf32> to vector<8x128xf32>
    %cst_58 = arith.constant dense<0.000000e+00> : vector<8x128xf32>
    %124 = tpu.matmul %112, %3, %cst_58 {dimension_numbers = #tpu.dot_dimension_numbers<[1], [0], [0], [1], [0, 0, 1, 1], [], []>} : vector<8x128xf32>, vector<128x128xf32>, vector<8x128xf32> -> vector<8x128xf32>
    %125 = arith.addf %123, %124 : vector<8x128xf32>
    %126 = arith.mulf %6, %111 : vector<8x128xf32>
    %127 = arith.addf %126, %125 : vector<8x128xf32>
    %128 = math.tanh %127 : vector<8x128xf32>
    %129 = arith.index_cast %c7_i32 : i32 to index
    %c0_59 = arith.constant 0 : index
    %c0_60 = arith.constant 0 : index
    %130 = vector.load %arg6[%129, %c0_59, %c0_60] : memref<8x8x256xf32, #tpu.memory_space<vmem>>, vector<1x8x128xf32>
    %131 = vector.shape_cast %130 : vector<1x8x128xf32> to vector<8x128xf32>
    %132 = vector.shape_cast %128 : vector<8x128xf32> to vector<1x8x128xf32>
    tpu.vector_store %arg6[%129, %c0_59, %c0_60], %132 {strides = array<i32>} : memref<8x8x256xf32, #tpu.memory_space<vmem>>, vector<1x8x128xf32>,
    %133 = arith.index_cast %c7_i32 : i32 to index
    %c0_61 = arith.constant 0 : index
    %c128_62 = arith.constant 128 : index
    %134 = vector.load %arg6[%133, %c0_61, %c128_62] : memref<8x8x256xf32, #tpu.memory_space<vmem>>, vector<1x8x128xf32>
    %135 = vector.shape_cast %134 : vector<1x8x128xf32> to vector<8x128xf32>
    %136 = vector.shape_cast %127 : vector<8x128xf32> to vector<1x8x128xf32>
    tpu.vector_store %arg6[%133, %c0_61, %c128_62], %136 {strides = array<i32>} : memref<8x8x256xf32, #tpu.memory_space<vmem>>, vector<1x8x128xf32>,
    %c8_i32 = arith.constant 8 : i32
    %c0_63 = arith.constant 0 : index
    %c0_64 = arith.constant 0 : index
    %137 = vector.load %arg7[%c0_63, %c0_64] : memref<8x128xf32, #tpu.memory_space<vmem>>, vector<8x128xf32>
    tpu.vector_store %arg7[%c0_63, %c0_64], %128 {strides = array<i32>} : memref<8x128xf32, #tpu.memory_space<vmem>>, vector<8x128xf32>,
    %c0_65 = arith.constant 0 : index
    %c0_66 = arith.constant 0 : index
    %138 = vector.load %arg8[%c0_65, %c0_66] : memref<8x128xf32, #tpu.memory_space<vmem>>, vector<8x128xf32>
    tpu.vector_store %arg8[%c0_65, %c0_66], %127 {strides = array<i32>} : memref<8x128xf32, #tpu.memory_space<vmem>>, vector<8x128xf32>,
    return
  }
  func.func @transform_0(%arg0: i32) -> (i32, i32, i32) {
    %c0_i32 = arith.constant 0 : i32
    %c0_i32_0 = arith.constant 0 : i32
    %c0_i32_1 = arith.constant 0 : i32
    return %arg0, %c0_i32, %c0_i32_0 : i32, i32, i32
  }
  func.func @transform_1(%arg0: i32) -> (i32, i32) {
    %c0_i32 = arith.constant 0 : i32
    %c0_i32_0 = arith.constant 0 : i32
    %c0_i32_1 = arith.constant 0 : i32
    return %c0_i32, %c0_i32_0 : i32, i32
  }
  func.func @transform_2(%arg0: i32) -> (i32, i32) {
    %c0_i32 = arith.constant 0 : i32
    %c0_i32_0 = arith.constant 0 : i32
    %c0_i32_1 = arith.constant 0 : i32
    return %c0_i32, %c0_i32_0 : i32, i32
  }
  func.func @transform_3(%arg0: i32) -> (i32, i32) {
    %c0_i32 = arith.constant 0 : i32
    %c0_i32_0 = arith.constant 0 : i32
    %c0_i32_1 = arith.constant 0 : i32
    return %c0_i32, %c0_i32_0 : i32, i32
  }
  func.func @transform_4(%arg0: i32) -> (i32, i32) {
    %c0_i32 = arith.constant 0 : i32
    %c0_i32_0 = arith.constant 0 : i32
    %c0_i32_1 = arith.constant 0 : i32
    return %c0_i32, %c0_i32_0 : i32, i32
  }
  func.func @transform_5(%arg0: i32) -> (i32, i32, i32) {
    %c0_i32 = arith.constant 0 : i32
    %c0_i32_0 = arith.constant 0 : i32
    %c0_i32_1 = arith.constant 0 : i32
    return %arg0, %c0_i32, %c0_i32_0 : i32, i32, i32
  }
}

</mosaic_0001>

<llo_original>
// kernel: vmtrnn_sequence.1
$region0: #{vmtrnn_sequence.1}
  #allocation0 [shape = 'u32[]', space=smem, size = 0x4, offset = 0x4, fixed_abs, tag = 'smem constant byte address 0x4 - core index']
  #allocation1 [shape = 'u32[72,128]{1,0:T(1,128)}', space=vmem, size = 0x9000, scoped, tag = 'internal scratch']
  #allocation2 [shape = 'f32[8,128]{1,0:T(8,128)}', space=vmem, size = 0x1000, scoped, tag = 'scratch operand']
  #allocation3 [shape = 'f32[8,128]{1,0:T(8,128)}', space=vmem, size = 0x1000, scoped, tag = 'scratch operand']
  %s0 = inlined_call_operand.vmem [shape: f32[8,8,128], index: 0, kind: input, shape index: {}]
  %s1 = inlined_call_operand.vmem [shape: f32[8,128], index: 1, kind: input, shape index: {}]
  %s2 = inlined_call_operand.vmem [shape: f32[8,128], index: 2, kind: input, shape index: {}]
  %s3 = inlined_call_operand.vmem [shape: f32[128,128], index: 3, kind: input, shape index: {}]
  %s4 = inlined_call_operand.vmem [shape: f32[1,128], index: 4, kind: input, shape index: {}]
  %s5 = inlined_call_operand.vmem [shape: f32[8,8,256], index: 5, kind: output, shape index: {}]
  %s6 = sld [smem:[#allocation0]]
  $region34: #{vmtrnn_sequence.1} parent=0
    _
  %s8 = ssub.s32 1, %s6
  %s9 = scalar_select 0, %s8, %s6
  // Predicated region
  $region2: #{vmtrnn_sequence.1} parent=0 // pred_check
    _
  $region3: #{vmtrnn_sequence.1} parent=0 // pred_check_branch
    %11 = sbr.rel (0) target = $region5
  $region4: #{vmtrnn_sequence.1} parent=0 // pred_region
    _
  $region5: #{vmtrnn_sequence.1} parent=0 // pred_fallthru
    _
  // Predicated region
  $region6: #{vmtrnn_sequence.1} parent=0 // pred_check
    _
  $region7: #{vmtrnn_sequence.1} parent=0 // pred_check_branch
    %13 = sbr.rel (0) target = $region9
  $region8: #{vmtrnn_sequence.1} parent=0 // pred_region
    _
  $region9: #{vmtrnn_sequence.1} parent=0 // pred_fallthru
    _
  // Predicated region
  $region10: #{vmtrnn_sequence.1} parent=0 // pred_check
    _
  $region11: #{vmtrnn_sequence.1} parent=0 // pred_check_branch
    %15 = sbr.rel (0) target = $region13
  $region12: #{vmtrnn_sequence.1} parent=0 // pred_region
    _
  $region13: #{vmtrnn_sequence.1} parent=0 // pred_fallthru
    _
  // Predicated region
  $region14: #{vmtrnn_sequence.1} parent=0 // pred_check
    _
  $region15: #{vmtrnn_sequence.1} parent=0 // pred_check_branch
    %17 = sbr.rel (0) target = $region17
  $region16: #{vmtrnn_sequence.1} parent=0 // pred_region
    _
  $region17: #{vmtrnn_sequence.1} parent=0 // pred_fallthru
    _
  // Predicated region
  $region18: #{vmtrnn_sequence.1} parent=0 // pred_check
    _
  $region19: #{vmtrnn_sequence.1} parent=0 // pred_check_branch
    %19 = sbr.rel (0) target = $region21
  $region20: #{vmtrnn_sequence.1} parent=0 // pred_region
    _
  $region21: #{vmtrnn_sequence.1} parent=0 // pred_fallthru
    _
  %p20 = scmp.eq.s32.totalorder 0, 0
  // Predicated region
  $region22: #{vmtrnn_sequence.1} parent=0 // pred_check
    %p21 = pneg %p20
  $region23: #{vmtrnn_sequence.1} parent=0 // pred_check_branch
    %23 = sbr.rel (%p21) target = $region25
  $region24: #{vmtrnn_sequence.1} parent=0 // pred_region
    %v24 = vld [vmem:[%s1] sm:$0xff]
    %25 = vst [vmem:[#allocation2] sm:$0xff] %v24
    %v26 = vld [vmem:[%s2] sm:$0xff]
    %27 = vst [vmem:[#allocation3] sm:$0xff] %v26
  $region25: #{vmtrnn_sequence.1} parent=0 // pred_fallthru
    _
  %v28 = vld [vmem:[%s3] sm:$0xff]
  %v29 = vld [vmem:[%s3 + $0x8] sm:$0xff]
  %v30 = vld [vmem:[%s3 + $0x10] sm:$0xff]
  %v31 = vld [vmem:[%s3 + $0x18] sm:$0xff]
  %v32 = vld [vmem:[%s3 + $0x20] sm:$0xff]
  %v33 = vld [vmem:[%s3 + $0x28] sm:$0xff]
  %v34 = vld [vmem:[%s3 + $0x30] sm:$0xff]
  %v35 = vld [vmem:[%s3 + $0x38] sm:$0xff]
  %v36 = vld [vmem:[%s3 + $0x40] sm:$0xff]
  %v37 = vld [vmem:[%s3 + $0x48] sm:$0xff]
  %v38 = vld [vmem:[%s3 + $0x50] sm:$0xff]
  %v39 = vld [vmem:[%s3 + $0x58] sm:$0xff]
  %v40 = vld [vmem:[%s3 + $0x60] sm:$0xff]
  %v41 = vld [vmem:[%s3 + $0x68] sm:$0xff]
  %v42 = vld [vmem:[%s3 + $0x70] sm:$0xff]
  %v43 = vld [vmem:[%s3 + $0x78] sm:$0xff]
  %v44 = vld [vmem:[%s4] sm:$0x1]
  %v46 = vperm.slane %v44, 0
  %v48 = vld [vmem:[#allocation2] sm:$0xff]
  %v49 = vld [vmem:[#allocation3] sm:$0xff]
  %v50 = vld [vmem:[%s0] sm:$0xff]
  %51 = vmatpush.msra.mxu0 %v43
  %52 = vmatpush.msra.mxu0 %v42
  %53 = vmatpush.msra.mxu0 %v41
  %54 = vmatpush.msra.mxu0 %v40
  %55 = vmatpush.msra.mxu0 %v39
  %56 = vmatpush.msra.mxu0 %v38
  %57 = vmatpush.msra.mxu0 %v37
  %58 = vmatpush.msra.mxu0 %v36
  %59 = vmatpush.msra.mxu0 %v35
  %60 = vmatpush.msra.mxu0 %v34
  %61 = vmatpush.msra.mxu0 %v33
  %62 = vmatpush.msra.mxu0 %v32
  %63 = vmatpush.msra.mxu0 %v31
  %64 = vmatpush.msra.mxu0 %v30
  %65 = vmatpush.msra.mxu0 %v29
  %66 = vmatpush.msra.mxu0 %v28
  %67 = vmatmul.f32.gmra.mxu0 %v48
  %v68 = vpop.f32.mrf.mxu0
  %v69 = vadd.f32 0.0, %v68
  %70 = vdwg.mxu0
  %v71 = vadd.f32 %v50, %v69
  %v72 = vmul.f32 %v46, %v49
  %v73 = vadd.f32 %v72, %v71
  %v74 = vtanh.pop %v73
  %75 = vst [vmem:[%s5] sm:$0xff] %v74
  %76 = vst [vmem:[%s5 + $0x8] sm:$0xff] %v73
  %s77 = scalar_lea.vmem %s0, 8
  %v78 = vld [vmem:[%s77] sm:$0xff]
  %79 = vmatpush.msra.mxu0 %v43
  %80 = vmatpush.msra.mxu0 %v42
  %81 = vmatpush.msra.mxu0 %v41
  %82 = vmatpush.msra.mxu0 %v40
  %83 = vmatpush.msra.mxu0 %v39
  %84 = vmatpush.msra.mxu0 %v38
  %85 = vmatpush.msra.mxu0 %v37
  %86 = vmatpush.msra.mxu0 %v36
  %87 = vmatpush.msra.mxu0 %v35
  %88 = vmatpush.msra.mxu0 %v34
  %89 = vmatpush.msra.mxu0 %v33
  %90 = vmatpush.msra.mxu0 %v32
  %91 = vmatpush.msra.mxu0 %v31
  %92 = vmatpush.msra.mxu0 %v30
  %93 = vmatpush.msra.mxu0 %v29
  %94 = vmatpush.msra.mxu0 %v28
  %95 = vmatmul.f32.gmra.mxu0 %v74
  %v96 = vpop.f32.mrf.mxu0
  %v97 = vadd.f32 0.0, %v96
  %98 = vdwg.mxu0
  %v99 = vadd.f32 %v78, %v97
  %v100 = vmul.f32 %v46, %v73
  %v101 = vadd.f32 %v100, %v99
  %v102 = vtanh.pop %v101
  %s103 = scalar_lea.vmem %s5, 16
  %104 = vst [vmem:[%s103] sm:$0xff] %v102
  %105 = vst [vmem:[%s103 + $0x8] sm:$0xff] %v101
  %s106 = scalar_lea.vmem %s0, 16
  %v107 = vld [vmem:[%s106] sm:$0xff]
  %108 = vmatpush.msra.mxu0 %v43
  %109 = vmatpush.msra.mxu0 %v42
  %110 = vmatpush.msra.mxu0 %v41
  %111 = vmatpush.msra.mxu0 %v40
  %112 = vmatpush.msra.mxu0 %v39
  %113 = vmatpush.msra.mxu0 %v38
  %114 = vmatpush.msra.mxu0 %v37
  %115 = vmatpush.msra.mxu0 %v36
  %116 = vmatpush.msra.mxu0 %v35
  %117 = vmatpush.msra.mxu0 %v34
  %118 = vmatpush.msra.mxu0 %v33
  %119 = vmatpush.msra.mxu0 %v32
  %120 = vmatpush.msra.mxu0 %v31
  %121 = vmatpush.msra.mxu0 %v30
  %122 = vmatpush.msra.mxu0 %v29
  %123 = vmatpush.msra.mxu0 %v28
  %124 = vmatmul.f32.gmra.mxu0 %v102
  %v125 = vpop.f32.mrf.mxu0
  %v126 = vadd.f32 0.0, %v125
  %127 = vdwg.mxu0
  %v128 = vadd.f32 %v107, %v126
  %v129 = vmul.f32 %v46, %v101
  %v130 = vadd.f32 %v129, %v128
  %v131 = vtanh.pop %v130
  %s132 = scalar_lea.vmem %s5, 32
  %133 = vst [vmem:[%s132] sm:$0xff] %v131
  %134 = vst [vmem:[%s132 + $0x8] sm:$0xff] %v130
  %s135 = scalar_lea.vmem %s0, 24
  %v136 = vld [vmem:[%s135] sm:$0xff]
  %137 = vmatpush.msra.mxu0 %v43
  %138 = vmatpush.msra.mxu0 %v42
  %139 = vmatpush.msra.mxu0 %v41
  %140 = vmatpush.msra.mxu0 %v40
  %141 = vmatpush.msra.mxu0 %v39
  %142 = vmatpush.msra.mxu0 %v38
  %143 = vmatpush.msra.mxu0 %v37
  %144 = vmatpush.msra.mxu0 %v36
  %145 = vmatpush.msra.mxu0 %v35
  %146 = vmatpush.msra.mxu0 %v34
  %147 = vmatpush.msra.mxu0 %v33
  %148 = vmatpush.msra.mxu0 %v32
  %149 = vmatpush.msra.mxu0 %v31
  %150 = vmatpush.msra.mxu0 %v30
  %151 = vmatpush.msra.mxu0 %v29
  %152 = vmatpush.msra.mxu0 %v28
  %153 = vmatmul.f32.gmra.mxu0 %v131
  %v154 = vpop.f32.mrf.mxu0
  %v155 = vadd.f32 0.0, %v154
  %156 = vdwg.mxu0
  %v157 = vadd.f32 %v136, %v155
  %v158 = vmul.f32 %v46, %v130
  %v159 = vadd.f32 %v158, %v157
  %v160 = vtanh.pop %v159
  %s161 = scalar_lea.vmem %s5, 48
  %162 = vst [vmem:[%s161] sm:$0xff] %v160
  %163 = vst [vmem:[%s161 + $0x8] sm:$0xff] %v159
  %s164 = scalar_lea.vmem %s0, 32
  %v165 = vld [vmem:[%s164] sm:$0xff]
  %166 = vmatpush.msra.mxu0 %v43
  %167 = vmatpush.msra.mxu0 %v42
  %168 = vmatpush.msra.mxu0 %v41
  %169 = vmatpush.msra.mxu0 %v40
  %170 = vmatpush.msra.mxu0 %v39
  %171 = vmatpush.msra.mxu0 %v38
  %172 = vmatpush.msra.mxu0 %v37
  %173 = vmatpush.msra.mxu0 %v36
  %174 = vmatpush.msra.mxu0 %v35
  %175 = vmatpush.msra.mxu0 %v34
  %176 = vmatpush.msra.mxu0 %v33
  %177 = vmatpush.msra.mxu0 %v32
  %178 = vmatpush.msra.mxu0 %v31
  %179 = vmatpush.msra.mxu0 %v30
  %180 = vmatpush.msra.mxu0 %v29
  %181 = vmatpush.msra.mxu0 %v28
  %182 = vmatmul.f32.gmra.mxu0 %v160
  %v183 = vpop.f32.mrf.mxu0
  %v184 = vadd.f32 0.0, %v183
  %185 = vdwg.mxu0
  %v186 = vadd.f32 %v165, %v184
  %v187 = vmul.f32 %v46, %v159
  %v188 = vadd.f32 %v187, %v186
  %v189 = vtanh.pop %v188
  %s190 = scalar_lea.vmem %s5, 64
  %191 = vst [vmem:[%s190] sm:$0xff] %v189
  %192 = vst [vmem:[%s190 + $0x8] sm:$0xff] %v188
  %s193 = scalar_lea.vmem %s0, 40
  %v194 = vld [vmem:[%s193] sm:$0xff]
  %195 = vmatpush.msra.mxu0 %v43
  %196 = vmatpush.msra.mxu0 %v42
  %197 = vmatpush.msra.mxu0 %v41
  %198 = vmatpush.msra.mxu0 %v40
  %199 = vmatpush.msra.mxu0 %v39
  %200 = vmatpush.msra.mxu0 %v38
  %201 = vmatpush.msra.mxu0 %v37
  %202 = vmatpush.msra.mxu0 %v36
  %203 = vmatpush.msra.mxu0 %v35
  %204 = vmatpush.msra.mxu0 %v34
  %205 = vmatpush.msra.mxu0 %v33
  %206 = vmatpush.msra.mxu0 %v32
  %207 = vmatpush.msra.mxu0 %v31
  %208 = vmatpush.msra.mxu0 %v30
  %209 = vmatpush.msra.mxu0 %v29
  %210 = vmatpush.msra.mxu0 %v28
  %211 = vmatmul.f32.gmra.mxu0 %v189
  %v212 = vpop.f32.mrf.mxu0
  %v213 = vadd.f32 0.0, %v212
  %214 = vdwg.mxu0
  %v215 = vadd.f32 %v194, %v213
  %v216 = vmul.f32 %v46, %v188
  %v217 = vadd.f32 %v216, %v215
  %v218 = vtanh.pop %v217
  %s219 = scalar_lea.vmem %s5, 80
  %220 = vst [vmem:[%s219] sm:$0xff] %v218
  %221 = vst [vmem:[%s219 + $0x8] sm:$0xff] %v217
  %s222 = scalar_lea.vmem %s0, 48
  %v223 = vld [vmem:[%s222] sm:$0xff]
  %224 = vmatpush.msra.mxu0 %v43
  %225 = vmatpush.msra.mxu0 %v42
  %226 = vmatpush.msra.mxu0 %v41
  %227 = vmatpush.msra.mxu0 %v40
  %228 = vmatpush.msra.mxu0 %v39
  %229 = vmatpush.msra.mxu0 %v38
  %230 = vmatpush.msra.mxu0 %v37
  %231 = vmatpush.msra.mxu0 %v36
  %232 = vmatpush.msra.mxu0 %v35
  %233 = vmatpush.msra.mxu0 %v34
  %234 = vmatpush.msra.mxu0 %v33
  %235 = vmatpush.msra.mxu0 %v32
  %236 = vmatpush.msra.mxu0 %v31
  %237 = vmatpush.msra.mxu0 %v30
  %238 = vmatpush.msra.mxu0 %v29
  %239 = vmatpush.msra.mxu0 %v28
  %240 = vmatmul.f32.gmra.mxu0 %v218
  %v241 = vpop.f32.mrf.mxu0
  %v242 = vadd.f32 0.0, %v241
  %243 = vdwg.mxu0
  %v244 = vadd.f32 %v223, %v242
  %v245 = vmul.f32 %v46, %v217
  %v246 = vadd.f32 %v245, %v244
  %v247 = vtanh.pop %v246
  %s248 = scalar_lea.vmem %s5, 96
  %249 = vst [vmem:[%s248] sm:$0xff] %v247
  %250 = vst [vmem:[%s248 + $0x8] sm:$0xff] %v246
  %s251 = scalar_lea.vmem %s0, 56
  %v252 = vld [vmem:[%s251] sm:$0xff]
  %253 = vmatpush.msra.mxu0 %v43
  %254 = vmatpush.msra.mxu0 %v42
  %255 = vmatpush.msra.mxu0 %v41
  %256 = vmatpush.msra.mxu0 %v40
  %257 = vmatpush.msra.mxu0 %v39
  %258 = vmatpush.msra.mxu0 %v38
  %259 = vmatpush.msra.mxu0 %v37
  %260 = vmatpush.msra.mxu0 %v36
  %261 = vmatpush.msra.mxu0 %v35
  %262 = vmatpush.msra.mxu0 %v34
  %263 = vmatpush.msra.mxu0 %v33
  %264 = vmatpush.msra.mxu0 %v32
  %265 = vmatpush.msra.mxu0 %v31
  %266 = vmatpush.msra.mxu0 %v30
  %267 = vmatpush.msra.mxu0 %v29
  %268 = vmatpush.msra.mxu0 %v28
  %269 = vmatmul.f32.gmra.mxu0 %v247
  %v270 = vpop.f32.mrf.mxu0
  %v271 = vadd.f32 0.0, %v270
  %272 = vdwg.mxu0
  %v273 = vadd.f32 %v252, %v271
  %v274 = vmul.f32 %v46, %v246
  %v275 = vadd.f32 %v274, %v273
  %v276 = vtanh.pop %v275
  %s277 = scalar_lea.vmem %s5, 112
  %278 = vst [vmem:[%s277] sm:$0xff] %v276
  %279 = vst [vmem:[%s277 + $0x8] sm:$0xff] %v275
  %280 = vst [vmem:[#allocation2] sm:$0xff] %v276
  %281 = vst [vmem:[#allocation3] sm:$0xff] %v275
  // Predicated region
  $region26: #{vmtrnn_sequence.1} parent=0 // pred_check
    _
  $region27: #{vmtrnn_sequence.1} parent=0 // pred_check_branch
    %283 = sbr.rel (0) target = $region29
  $region28: #{vmtrnn_sequence.1} parent=0 // pred_region
    _
  $region29: #{vmtrnn_sequence.1} parent=0 // pred_fallthru
    _
  // Predicated region
  $region30: #{vmtrnn_sequence.1} parent=0 // pred_check
    _
  $region31: #{vmtrnn_sequence.1} parent=0 // pred_check_branch
    %285 = sbr.rel (0) target = $region33
  $region32: #{vmtrnn_sequence.1} parent=0 // pred_region
    _
  $region33: #{vmtrnn_sequence.1} parent=0 // pred_fallthru
    _

</llo_original>
